<compile_context>
chip_gen: v5e
topology: v5e:2x2
jax: 0.10.0
libtpu: 0.0.40
codegen_flags: <defaults>
</compile_context>

<pallas_src>
import jax
import jax.numpy as jnp
from jax.experimental import pallas as pl
from jax.experimental.pallas import tpu as pltpu

# ---- SPP_CNN default hyper-parameters, small test shapes ----
B = 2
C_IN = 4                      # input_nc
C_OUT = 4                     # output_nc defaults to input_nc
K = 21                        # kernel_size
N_LEVELS = 2
N_TASKS = 2
SHIFT = K - 1                 # SpatialPyramidPool1d shift
L = 64                        # (padded) input sequence length
LC = L - K + 1                # valid-conv output length (44)
CK = C_IN * K                 # im2col contraction dim (84)
N_LIN = 2 * C_OUT * (2 ** N_LEVELS - 1)   # fc1 input features (24)
BN_EPS = 1e-5
NEG_SLOPE = 0.01              # F.leaky_relu default

# One grid step processes B_TILE samples (whole batch here; per-step pipeline
# overhead dominates this tiny per-sample work).  See production notes above.
B_TILE = B


def spp_cnn_kernel(idx_ref,    # (4, B_TILE*LC) int32: rows = [pos-in-sample, f0, ceil(f0/2), floor(f0/2)]
                   xcol_ref,   # (CK, B_TILE*LC) bf16  im2col'd input, batch folded into lanes
                   w_ref,      # (2*C_OUT, CK)   bf16  BN-scale-folded, branch-stacked conv weight
                   bias_ref,   # (2*C_OUT, 1)    f32   folded BatchNorm bias
                   pmat_ref,   # (B_TILE*LC, 3*B_TILE) f32 pre-scaled avg-pool window matrix
                   wfc_ref,    # (N_TASKS, 6*C_OUT) f32 reordered fc1 weight
                   bfc_ref,    # (N_TASKS, 1)    f32   fc1 bias
                   out_ref):   # (N_TASKS, B_TILE) f32
    # --- conv1 + conv2 (+ folded BN scale) as ONE 2-D MXU matmul -------------
    y = jnp.dot(w_ref[...], xcol_ref[...],
                preferred_element_type=jnp.float32)        # (2C, B*LC) f32
    y = y + bias_ref[...]                                  # folded BatchNorm (inference)
    y = jnp.where(y > 0, y, NEG_SLOPE * y)                 # leaky_relu (f32 on the VPU)

    y1 = y[:C_OUT, :]                                      # -> max-pool SPP branch
    y2 = y[C_OUT:, :]                                      # -> avg-pool SPP branch

    # --- ragged SpatialPyramidPool1d, max branch -----------------------------
    # Per-lane ragged-window descriptors (f0 already clamped >= 1 on the host).
    pos = idx_ref[0:1, :]
    f0 = idx_ref[1:2, :]
    ce = idx_ref[2:3, :]
    fl = idx_ref[3:4, :]
    neg = jnp.float32(-jnp.inf)
    y1m0 = jnp.where(pos < f0, y1, neg)                    # level 0: window [0, f0)
    ym = jnp.concatenate(
        [y1m0,                                             # window 0: [0, f0)
         jnp.where(pos < ce, y1, neg),                     # window 1a: [0, ce)
         jnp.where(pos >= fl, y1m0, neg)],                 # window 1b: [fl, f0)  (reuses y1m0)
        axis=0)                                            # (3C, B*LC), row = w*C + c
    # One fused XLU reduction per sample (3 windows reduced together); static
    # lane slices only — no lane-splitting reshapes.
    spp_max = jnp.concatenate(
        [jnp.max(ym[:, b * LC:(b + 1) * LC], axis=1, keepdims=True)
         for b in range(B_TILE)],
        axis=1)                                            # (3C, B_TILE), row = w*C + c

    # --- avg branch: one MXU matmul against the pre-scaled window matrix -----
    spp_avg_cw = jnp.dot(y2, pmat_ref[...],
                         preferred_element_type=jnp.float32)  # (C, 3*B_TILE), col = w*B + b
    spp_avg = jnp.concatenate(
        [spp_avg_cw[:, w * B_TILE:(w + 1) * B_TILE] for w in range(3)],
        axis=0)                                            # (3C, B_TILE), row = w*C + c

    # --- fc1 over concat([spp_max, spp_avg]); lane dim = batch tile -----------
    feats = jnp.concatenate([spp_max, spp_avg], axis=0)    # (6C, B_TILE)
    out = jnp.dot(wfc_ref[...], feats,
                  preferred_element_type=jnp.float32)      # (N_TASKS, B_TILE)
    out_ref[...] = out + bfc_ref[...]


# ---------------- host-side packing / layout helpers ----------------
def im2col_2d(x):
    """x (B, C_IN, L) -> bf16 (C_IN*K, B*LC); row = c*K + k, col = b*LC + p."""
    cols = jnp.stack([x[:, :, k:k + LC] for k in range(K)], axis=2)   # (B, C_IN, K, LC)
    cols = jnp.transpose(cols, (1, 2, 0, 3))                          # (C_IN, K, B, LC)
    return cols.reshape(CK, B * LC).astype(jnp.bfloat16)


def ragged_window_aux(orig_len):
    """Per-lane ragged-window descriptors + pre-scaled avg-pool window matrix."""
    # Clamp so orig_len <= kernel_size-1 cannot produce empty windows / NaNs.
    f0 = jnp.maximum(orig_len.astype(jnp.int32) - SHIFT, 1)           # (B,)
    ce = (f0 + 1) // 2
    fl = f0 - ce
    pos = jnp.arange(LC, dtype=jnp.int32)

    rep = lambda v: jnp.repeat(v, LC)
    idx = jnp.stack([jnp.tile(pos, B), rep(f0), rep(ce), rep(fl)], axis=0)  # (4, B*LC)

    m0 = pos[None, :] < f0[:, None]                                   # (B, LC)
    m1a = pos[None, :] < ce[:, None]
    m1b = (pos[None, :] >= fl[:, None]) & m0
    w3 = jnp.stack([m0 / f0[:, None].astype(jnp.float32),             # pre-scaled 1/window_size
                    m1a / ce[:, None].astype(jnp.float32),
                    m1b / ce[:, None].astype(jnp.float32)],
                   axis=0).astype(jnp.float32)                        # (3, B, LC)
    eye = jnp.eye(B, dtype=jnp.float32)
    # pmat[b*LC + p, w*B + b'] = w3[w, b, p] * (b == b')   (block-diagonal over samples)
    pmat = jnp.einsum('wbp,bc->bpwc', w3, eye).reshape(B * LC, 3 * B)
    return idx, pmat


def spp_cnn_forward(x, orig_len, packed):
    w2d, bias, wfc, bfc = packed
    xcol = im2col_2d(x)
    idx, pmat = ragged_window_aux(orig_len)

    grid_spec = pltpu.PrefetchScalarGridSpec(
        num_scalar_prefetch=0,
        grid=(B // B_TILE,),
        in_specs=[
            pl.BlockSpec((4, B_TILE * LC), lambda i: (0, i)),
            pl.BlockSpec((CK, B_TILE * LC), lambda i: (0, i)),
            pl.BlockSpec((2 * C_OUT, CK), lambda i: (0, 0)),
            pl.BlockSpec((2 * C_OUT, 1), lambda i: (0, 0)),
            pl.BlockSpec((B_TILE * LC, 3 * B_TILE), lambda i: (i, i)),
            pl.BlockSpec((N_TASKS, 6 * C_OUT), lambda i: (0, 0)),
            pl.BlockSpec((N_TASKS, 1), lambda i: (0, 0)),
        ],
        out_specs=pl.BlockSpec((N_TASKS, B_TILE), lambda i: (0, i)),
    )
    out_tb = pl.pallas_call(
        spp_cnn_kernel,
        out_shape=jax.ShapeDtypeStruct((N_TASKS, B), jnp.float32),
        grid_spec=grid_spec,
        compiler_params=pltpu.CompilerParams(
            # Batch tiles are independent; with >= 2 tiles this shards across
            # v7x's two TensorCores (inert at grid=(1,), harmless on v5e/v6e).
            # At production B_TILE also set vmem_limit_bytes per generation
            # (v7x 64 MiB physical, v5e/v6e 128 MiB) with headroom for the
            # double-buffered bf16 xcol block.
            dimension_semantics=("parallel",)),
    )(idx, xcol, w2d, bias, pmat, wfc, bfc)
    return out_tb.T                                        # (B, N_TASKS)


# ---------------- deterministic parameter construction ----------------
def init_params(key):
    ks = jax.random.split(key, 14)
    w1 = 0.1 * jax.random.normal(ks[0], (C_OUT, C_IN, K), jnp.float32)
    w2 = 0.1 * jax.random.normal(ks[1], (C_OUT, C_IN, K), jnp.float32)
    gamma1 = 1.0 + 0.1 * jax.random.normal(ks[2], (C_OUT,), jnp.float32)
    beta1 = 0.1 * jax.random.normal(ks[3], (C_OUT,), jnp.float32)
    mean1 = 0.05 * jax.random.normal(ks[4], (C_OUT,), jnp.float32)
    var1 = 0.5 + jax.random.uniform(ks[5], (C_OUT,), jnp.float32)
    gamma2 = 1.0 + 0.1 * jax.random.normal(ks[6], (C_OUT,), jnp.float32)
    beta2 = 0.1 * jax.random.normal(ks[7], (C_OUT,), jnp.float32)
    mean2 = 0.05 * jax.random.normal(ks[8], (C_OUT,), jnp.float32)
    var2 = 0.5 + jax.random.uniform(ks[9], (C_OUT,), jnp.float32)
    w_fc = 0.1 * jax.random.normal(ks[10], (N_TASKS, N_LIN), jnp.float32)
    b_fc = 0.1 * jax.random.normal(ks[11], (N_TASKS,), jnp.float32)
    return dict(w1=w1, w2=w2,
                gamma1=gamma1, beta1=beta1, mean1=mean1, var1=var1,
                gamma2=gamma2, beta2=beta2, mean2=mean2, var2=var2,
                w_fc=w_fc, b_fc=b_fc)


def pack_params(p):
    def bn_fold(gamma, beta, mean, var):
        scale = gamma / jnp.sqrt(var + BN_EPS)
        return scale, beta - mean * scale

    s1, b1 = bn_fold(p["gamma1"], p["beta1"], p["mean1"], p["var1"])
    s2, b2 = bn_fold(p["gamma2"], p["beta2"], p["mean2"], p["var2"])

    # BN scale folded into conv weights; both branches stacked along C_OUT.
    w1s = p["w1"] * s1[:, None, None]                      # (C_OUT, C_IN, K)
    w2s = p["w2"] * s2[:, None, None]
    w2d = jnp.concatenate([w1s, w2s], axis=0).reshape(2 * C_OUT, CK).astype(jnp.bfloat16)
    bias = jnp.concatenate([b1, b2]).reshape(2 * C_OUT, 1)  # stays f32

    # Reorder fc1 weight columns from the PyTorch feature order
    #   [m0(C), m1 interleaved(2C), a0(C), a1 interleaved(2C)]
    # to the kernel's feature-row order: window-major, channel-minor
    #   [m0, m1a, m1b, a0, a1a, a1b], each block of length C.
    W = p["w_fc"]                                          # (N_TASKS, N_LIN)
    C = C_OUT
    wm0 = W[:, 0:C]
    wm1 = W[:, C:3 * C].reshape(N_TASKS, C, 2)
    wa0 = W[:, 3 * C:4 * C]
    wa1 = W[:, 4 * C:6 * C].reshape(N_TASKS, C, 2)
    wfc = jnp.concatenate([wm0, wm1[:, :, 0], wm1[:, :, 1],
                           wa0, wa1[:, :, 0], wa1[:, :, 1]], axis=1)  # (N_TASKS, 6C)
    bfc = p["b_fc"].reshape(N_TASKS, 1)
    return (w2d, bias, wfc, bfc)


# ---------------- pure-JAX reference (mirrors the PyTorch forward) ----------------
def reference_forward(x, orig_len, p):
    outs = []
    for i in range(B):
        xs = x[i]                                          # (C_IN, L)

        def conv_bn_act(w, gamma, beta, mean, var):
            y = jnp.zeros((C_OUT, LC), jnp.float32)
            for k in range(K):
                y = y + jnp.dot(w[:, :, k], xs[:, k:k + LC],
                                precision=jax.lax.Precision.HIGHEST)
            y = (y - mean[:, None]) / jnp.sqrt(var[:, None] + BN_EPS)
            y = y * gamma[:, None] + beta[:, None]
            return jnp.where(y > 0, y, NEG_SLOPE * y)

        y1 = conv_bn_act(p["w1"], p["gamma1"], p["beta1"], p["mean1"], p["var1"])
        y2 = conv_bn_act(p["w2"], p["gamma2"], p["beta2"], p["mean2"], p["var2"])

        f0 = int(orig_len[i]) - SHIFT
        ce = (f0 + 1) // 2
        fl = f0 // 2

        s1 = y1[:, :f0]
        m0 = jnp.max(s1, axis=1)
        m1 = jnp.stack([jnp.max(s1[:, :ce], axis=1),
                        jnp.max(s1[:, fl:fl + ce], axis=1)], axis=1)   # (C,2)
        feat1 = jnp.concatenate([m0, m1.reshape(-1)])

        s2 = y2[:, :f0]
        a0 = jnp.mean(s2, axis=1)
        a1 = jnp.stack([jnp.mean(s2[:, :ce], axis=1),
                        jnp.mean(s2[:, fl:fl + ce], axis=1)], axis=1)  # (C,2)
        feat2 = jnp.concatenate([a0, a1.reshape(-1)])

        feat = jnp.concatenate([feat1, feat2])                          # (N_LIN,)
        outs.append(jnp.sum(p["w_fc"] * feat[None, :], axis=1) + p["b_fc"])
    return jnp.stack(outs)


if __name__ == "__main__":
    key = jax.random.PRNGKey(0)
    kx, kp = jax.random.split(key)
    x = jax.random.normal(kx, (B, C_IN, L), jnp.float32)
    # per-sample original (un-padded) lengths of the raw input sequences
    orig_len = jnp.array([L, 50], dtype=jnp.int32)

    params_raw = init_params(kp)
    packed = pack_params(params_raw)

    out = spp_cnn_forward(x, orig_len, packed)
    out = jax.block_until_ready(out)

    ref = reference_forward(x, orig_len, params_raw)
    assert out.shape == (B, N_TASKS)
    # tolerance covers bf16-input / f32-accumulate MXU dots (default precision)
    assert jnp.allclose(out, ref, rtol=2e-2, atol=2e-2), (out, ref)
    print("KERNEL_OK")
</pallas_src>

<mosaic_0001>
module attributes {stable_mosaic.version = 11 : i64} {
  func.func @spp_cnn_kernel(%arg0: i32, %arg1: memref<4x88xi32, #tpu.memory_space<vmem>>, %arg2: memref<84x88xbf16, #tpu.memory_space<vmem>>, %arg3: memref<8x84xbf16, #tpu.memory_space<vmem>>, %arg4: memref<8x1xf32, #tpu.memory_space<vmem>>, %arg5: memref<88x6xf32, #tpu.memory_space<vmem>>, %arg6: memref<2x24xf32, #tpu.memory_space<vmem>>, %arg7: memref<2x1xf32, #tpu.memory_space<vmem>>, %arg8: memref<2x2xf32, #tpu.memory_space<vmem>>) attributes {dimension_semantics = [#tpu.dimension_semantics<parallel>], iteration_bounds = array<i64: 1>, scalar_prefetch = 0 : i64, scratch_operands = 0 : i64, tpu.core_type = #tpu.core_type<tc>, window_params = [{transform_indices = @transform_0, window_bounds = array<i64: 4, 88>}, {transform_indices = @transform_1, window_bounds = array<i64: 84, 88>}, {pipeline_mode = #tpu.pipeline_mode<synchronous>, transform_indices = @transform_2, window_bounds = array<i64: 8, 84>}, {pipeline_mode = #tpu.pipeline_mode<synchronous>, transform_indices = @transform_3, window_bounds = array<i64: 8, 1>}, {transform_indices = @transform_4, window_bounds = array<i64: 88, 6>}, {pipeline_mode = #tpu.pipeline_mode<synchronous>, transform_indices = @transform_5, window_bounds = array<i64: 2, 24>}, {pipeline_mode = #tpu.pipeline_mode<synchronous>, transform_indices = @transform_6, window_bounds = array<i64: 2, 1>}, {transform_indices = @transform_7, window_bounds = array<i64: 2, 2>}]} {
    %c0 = arith.constant 0 : index
    %c0_0 = arith.constant 0 : index
    %0 = vector.load %arg3[%c0, %c0_0] : memref<8x84xbf16, #tpu.memory_space<vmem>>, vector<8x84xbf16>
    %c0_1 = arith.constant 0 : index
    %c0_2 = arith.constant 0 : index
    %1 = vector.load %arg2[%c0_1, %c0_2] : memref<84x88xbf16, #tpu.memory_space<vmem>>, vector<84x88xbf16>
    %cst = arith.constant dense<0.000000e+00> : vector<8x88xf32>
    %2 = tpu.matmul %0, %1, %cst {dimension_numbers = #tpu.dot_dimension_numbers<[1], [0], [0], [1], [0, 0, 1, 1], [], []>} : vector<8x84xbf16>, vector<84x88xbf16>, vector<8x88xf32> -> vector<8x88xf32>
    %c0_3 = arith.constant 0 : index
    %c0_4 = arith.constant 0 : index
    %3 = vector.load %arg4[%c0_3, %c0_4] : memref<8x1xf32, #tpu.memory_space<vmem>>, vector<8x1xf32>
    %4 = vector.broadcast %3 : vector<8x1xf32> to vector<8x88xf32>
    %5 = arith.addf %2, %4 : vector<8x88xf32>
    %cst_5 = arith.constant 0.000000e+00 : f32
    %6 = vector.broadcast %cst_5 : f32 to vector<8x88xf32>
    %7 = arith.cmpf ogt, %5, %6 : vector<8x88xf32>
    %cst_6 = arith.constant 0.00999999977 : f32
    %8 = vector.broadcast %cst_6 : f32 to vector<8x88xf32>
    %9 = arith.mulf %8, %5 : vector<8x88xf32>
    %10 = arith.select %7, %5, %9 : vector<8x88xi1>, vector<8x88xf32>
    %11 = vector.extract_strided_slice %10 {offsets = [0, 0], sizes = [4, 88], strides = [1, 1]} : vector<8x88xf32> to vector<4x88xf32>
    %12 = vector.extract_strided_slice %10 {offsets = [4, 0], sizes = [4, 88], strides = [1, 1]} : vector<8x88xf32> to vector<4x88xf32>
    %c0_7 = arith.constant 0 : index
    %c0_8 = arith.constant 0 : index
    %13 = vector.load %arg1[%c0_7, %c0_8] : memref<4x88xi32, #tpu.memory_space<vmem>>, vector<1x88xi32>
    %c1 = arith.constant 1 : index
    %c0_9 = arith.constant 0 : index
    %14 = vector.load %arg1[%c1, %c0_9] : memref<4x88xi32, #tpu.memory_space<vmem>>, vector<1x88xi32>
    %c2 = arith.constant 2 : index
    %c0_10 = arith.constant 0 : index
    %15 = vector.load %arg1[%c2, %c0_10] : memref<4x88xi32, #tpu.memory_space<vmem>>, vector<1x88xi32>
    %c3 = arith.constant 3 : index
    %c0_11 = arith.constant 0 : index
    %16 = vector.load %arg1[%c3, %c0_11] : memref<4x88xi32, #tpu.memory_space<vmem>>, vector<1x88xi32>
    %17 = arith.cmpi slt, %13, %14 : vector<1x88xi32>
    %cst_12 = arith.constant 0xFF800000 : f32
    %18 = vector.shape_cast %17 : vector<1x88xi1> to vector<1x88xi1>
    %19 = vector.broadcast %18 : vector<1x88xi1> to vector<4x88xi1>
    %20 = vector.broadcast %cst_12 : f32 to vector<4x88xf32>
    %21 = arith.select %19, %11, %20 : vector<4x88xi1>, vector<4x88xf32>
    %22 = arith.cmpi slt, %13, %15 : vector<1x88xi32>
    %cst_13 = arith.constant 0xFF800000 : f32
    %23 = vector.shape_cast %22 : vector<1x88xi1> to vector<1x88xi1>
    %24 = vector.broadcast %23 : vector<1x88xi1> to vector<4x88xi1>
    %25 = vector.broadcast %cst_13 : f32 to vector<4x88xf32>
    %26 = arith.select %24, %11, %25 : vector<4x88xi1>, vector<4x88xf32>
    %27 = arith.cmpi sge, %13, %16 : vector<1x88xi32>
    %cst_14 = arith.constant 0xFF800000 : f32
    %28 = vector.shape_cast %27 : vector<1x88xi1> to vector<1x88xi1>
    %29 = vector.broadcast %28 : vector<1x88xi1> to vector<4x88xi1>
    %30 = vector.broadcast %cst_14 : f32 to vector<4x88xf32>
    %31 = arith.select %29, %21, %30 : vector<4x88xi1>, vector<4x88xf32>
    %32 = tpu.concatenate %21, %26, %31 in 0 : vector<4x88xf32>, vector<4x88xf32>, vector<4x88xf32> -> vector<12x88xf32>
    %33 = vector.extract_strided_slice %32 {offsets = [0, 0], sizes = [12, 44], strides = [1, 1]} : vector<12x88xf32> to vector<12x44xf32>
    %cst_15 = arith.constant dense<0xFF800000> : vector<12xf32>
    %34 = vector.multi_reduction <maximumf>, %33, %cst_15 [1] : vector<12x44xf32> to vector<12xf32>
    %35 = vector.shape_cast %34 : vector<12xf32> to vector<12x1xf32>
    %36 = vector.extract_strided_slice %32 {offsets = [0, 44], sizes = [12, 44], strides = [1, 1]} : vector<12x88xf32> to vector<12x44xf32>
    %cst_16 = arith.constant dense<0xFF800000> : vector<12xf32>
    %37 = vector.multi_reduction <maximumf>, %36, %cst_16 [1] : vector<12x44xf32> to vector<12xf32>
    %38 = vector.shape_cast %37 : vector<12xf32> to vector<12x1xf32>
    %39 = tpu.concatenate %35, %38 in 1 : vector<12x1xf32>, vector<12x1xf32> -> vector<12x2xf32>
    %c0_17 = arith.constant 0 : index
    %c0_18 = arith.constant 0 : index
    %40 = vector.load %arg5[%c0_17, %c0_18] : memref<88x6xf32, #tpu.memory_space<vmem>>, vector<88x6xf32>
    %cst_19 = arith.constant dense<0.000000e+00> : vector<4x6xf32>
    %41 = tpu.matmul %12, %40, %cst_19 {dimension_numbers = #tpu.dot_dimension_numbers<[1], [0], [0], [1], [0, 0, 1, 1], [], []>} : vector<4x88xf32>, vector<88x6xf32>, vector<4x6xf32> -> vector<4x6xf32>
    %42 = vector.extract_strided_slice %41 {offsets = [0, 0], sizes = [4, 2], strides = [1, 1]} : vector<4x6xf32> to vector<4x2xf32>
    %43 = vector.extract_strided_slice %41 {offsets = [0, 2], sizes = [4, 2], strides = [1, 1]} : vector<4x6xf32> to vector<4x2xf32>
    %44 = vector.extract_strided_slice %41 {offsets = [0, 4], sizes = [4, 2], strides = [1, 1]} : vector<4x6xf32> to vector<4x2xf32>
    %45 = tpu.concatenate %42, %43, %44 in 0 : vector<4x2xf32>, vector<4x2xf32>, vector<4x2xf32> -> vector<12x2xf32>
    %46 = tpu.concatenate %39, %45 in 0 : vector<12x2xf32>, vector<12x2xf32> -> vector<24x2xf32>
    %c0_20 = arith.constant 0 : index
    %c0_21 = arith.constant 0 : index
    %47 = vector.load %arg6[%c0_20, %c0_21] : memref<2x24xf32, #tpu.memory_space<vmem>>, vector<2x24xf32>
    %cst_22 = arith.constant dense<0.000000e+00> : vector<2x2xf32>
    %48 = tpu.matmul %47, %46, %cst_22 {dimension_numbers = #tpu.dot_dimension_numbers<[1], [0], [0], [1], [0, 0, 1, 1], [], []>} : vector<2x24xf32>, vector<24x2xf32>, vector<2x2xf32> -> vector<2x2xf32>
    %c0_23 = arith.constant 0 : index
    %c0_24 = arith.constant 0 : index
    %49 = vector.load %arg7[%c0_23, %c0_24] : memref<2x1xf32, #tpu.memory_space<vmem>>, vector<2x1xf32>
    %50 = vector.broadcast %49 : vector<2x1xf32> to vector<2x2xf32>
    %51 = arith.addf %48, %50 : vector<2x2xf32>
    %c0_25 = arith.constant 0 : index
    %c0_26 = arith.constant 0 : index
    %52 = vector.load %arg8[%c0_25, %c0_26] : memref<2x2xf32, #tpu.memory_space<vmem>>, vector<2x2xf32>
    tpu.vector_store %arg8[%c0_25, %c0_26], %51 {strides = array<i32>} : memref<2x2xf32, #tpu.memory_space<vmem>>, vector<2x2xf32>,
    return
  }
  func.func @transform_0(%arg0: i32) -> (i32, i32) {
    %c0_i32 = arith.constant 0 : i32
    %c0_i32_0 = arith.constant 0 : i32
    return %c0_i32, %arg0 : i32, i32
  }
  func.func @transform_1(%arg0: i32) -> (i32, i32) {
    %c0_i32 = arith.constant 0 : i32
    %c0_i32_0 = arith.constant 0 : i32
    return %c0_i32, %arg0 : i32, i32
  }
  func.func @transform_2(%arg0: i32) -> (i32, i32) {
    %c0_i32 = arith.constant 0 : i32
    %c0_i32_0 = arith.constant 0 : i32
    %c0_i32_1 = arith.constant 0 : i32
    return %c0_i32, %c0_i32_0 : i32, i32
  }
  func.func @transform_3(%arg0: i32) -> (i32, i32) {
    %c0_i32 = arith.constant 0 : i32
    %c0_i32_0 = arith.constant 0 : i32
    %c0_i32_1 = arith.constant 0 : i32
    return %c0_i32, %c0_i32_0 : i32, i32
  }
  func.func @transform_4(%arg0: i32) -> (i32, i32) {
    %c0_i32 = arith.constant 0 : i32
    return %arg0, %arg0 : i32, i32
  }
  func.func @transform_5(%arg0: i32) -> (i32, i32) {
    %c0_i32 = arith.constant 0 : i32
    %c0_i32_0 = arith.constant 0 : i32
    %c0_i32_1 = arith.constant 0 : i32
    return %c0_i32, %c0_i32_0 : i32, i32
  }
  func.func @transform_6(%arg0: i32) -> (i32, i32) {
    %c0_i32 = arith.constant 0 : i32
    %c0_i32_0 = arith.constant 0 : i32
    %c0_i32_1 = arith.constant 0 : i32
    return %c0_i32, %c0_i32_0 : i32, i32
  }
  func.func @transform_7(%arg0: i32) -> (i32, i32) {
    %c0_i32 = arith.constant 0 : i32
    %c0_i32_0 = arith.constant 0 : i32
    return %c0_i32, %arg0 : i32, i32
  }
}

</mosaic_0001>

<llo_original>
// kernel: tpu_custom_call.1
$region0: #{tpu_custom_call.1}
  #allocation0 [shape = 'u32[]', space=smem, size = 0x4, offset = 0x4, fixed_abs, tag = 'smem constant byte address 0x4 - core index']
  #allocation1 [shape = 'u32[72,128]{1,0:T(1,128)}', space=vmem, size = 0x9000, scoped, tag = 'internal scratch']
  %s0 = inlined_call_operand.vmem [shape: s32[4,88], index: 0, kind: input, shape index: {}]
  %s1 = inlined_call_operand.vmem [shape: bf16[84,88], index: 1, kind: input, shape index: {}]
  %s2 = inlined_call_operand.vmem [shape: bf16[8,84], index: 2, kind: input, shape index: {}]
  %s3 = inlined_call_operand.vmem [shape: f32[8,1], index: 3, kind: input, shape index: {}]
  %s4 = inlined_call_operand.vmem [shape: f32[88,6], index: 4, kind: input, shape index: {}]
  %s5 = inlined_call_operand.vmem [shape: f32[2,24], index: 5, kind: input, shape index: {}]
  %s6 = inlined_call_operand.vmem [shape: f32[2,1], index: 6, kind: input, shape index: {}]
  %s7 = inlined_call_operand.hbm [shape: f32[2,2], index: 7, kind: output, shape index: {}]
  %s8 = sld [smem:[#allocation0]]
  $region38: #{tpu_custom_call.1} parent=0
    _
  %s10 = ssub.s32 1, %s8
  %s11 = scalar_select 0, %s10, %s8
  $region1: #{tpu_custom_call.1} parent=0
    #allocation2 [shape = 'u8[1024]{0}', space=vmem, size = 0x400, scoped, tag = 'output window, operand 0, single buffered']
    #allocation3 [shape = 's32[1]{0}', space=sflag, size = 0x4, scoped, tag = 'scoped memory for tpu_custom_call.1']
    %12 = vsyncpa [#allocation3], 0
    // Predicated region
    $region2: #{tpu_custom_call.1} parent=1 // pred_check
      _
    $region3: #{tpu_custom_call.1} parent=1 // pred_check_branch
      %14 = sbr.rel (0) target = $region5
    $region4: #{tpu_custom_call.1} parent=1 // pred_region
      _
    $region5: #{tpu_custom_call.1} parent=1 // pred_fallthru
      _
    // Predicated region
    $region6: #{tpu_custom_call.1} parent=1 // pred_check
      _
    $region7: #{tpu_custom_call.1} parent=1 // pred_check_branch
      %16 = sbr.rel (0) target = $region9
    $region8: #{tpu_custom_call.1} parent=1 // pred_region
      _
    $region9: #{tpu_custom_call.1} parent=1 // pred_fallthru
      _
    // Predicated region
    $region10: #{tpu_custom_call.1} parent=1 // pred_check
      _
    $region11: #{tpu_custom_call.1} parent=1 // pred_check_branch
      %18 = sbr.rel (0) target = $region13
    $region12: #{tpu_custom_call.1} parent=1 // pred_region
      _
    $region13: #{tpu_custom_call.1} parent=1 // pred_fallthru
      _
    // Predicated region
    $region14: #{tpu_custom_call.1} parent=1 // pred_check
      _
    $region15: #{tpu_custom_call.1} parent=1 // pred_check_branch
      %20 = sbr.rel (0) target = $region17
    $region16: #{tpu_custom_call.1} parent=1 // pred_region
      _
    $region17: #{tpu_custom_call.1} parent=1 // pred_fallthru
      _
    // Predicated region
    $region18: #{tpu_custom_call.1} parent=1 // pred_check
      _
    $region19: #{tpu_custom_call.1} parent=1 // pred_check_branch
      %22 = sbr.rel (0) target = $region21
    $region20: #{tpu_custom_call.1} parent=1 // pred_region
      _
    $region21: #{tpu_custom_call.1} parent=1 // pred_fallthru
      _
    // Predicated region
    $region22: #{tpu_custom_call.1} parent=1 // pred_check
      _
    $region23: #{tpu_custom_call.1} parent=1 // pred_check_branch
      %24 = sbr.rel (0) target = $region25
    $region24: #{tpu_custom_call.1} parent=1 // pred_region
      _
    $region25: #{tpu_custom_call.1} parent=1 // pred_fallthru
      _
    // Predicated region
    $region26: #{tpu_custom_call.1} parent=1 // pred_check
      _
    $region27: #{tpu_custom_call.1} parent=1 // pred_check_branch
      %26 = sbr.rel (0) target = $region29
    $region28: #{tpu_custom_call.1} parent=1 // pred_region
      _
    $region29: #{tpu_custom_call.1} parent=1 // pred_fallthru
      _
    %v28 = vld [vmem:[%s2] sm:$0xf]
    %v29 = vld [vmem:[%s1] sm:$0xf]
    %v30 = vld [vmem:[%s1 + $0x4] sm:$0xf]
    %v31 = vld [vmem:[%s1 + $0x8] sm:$0xf]
    %v32 = vld [vmem:[%s1 + $0xc] sm:$0xf]
    %v33 = vld [vmem:[%s1 + $0x10] sm:$0xf]
    %v34 = vld [vmem:[%s1 + $0x14] sm:$0xf]
    %v35 = vld [vmem:[%s1 + $0x18] sm:$0xf]
    %v36 = vld [vmem:[%s1 + $0x1c] sm:$0xf]
    %v37 = vld [vmem:[%s1 + $0x20] sm:$0xf]
    %v38 = vld [vmem:[%s1 + $0x24] sm:$0xf]
    %v39 = vld [vmem:[%s1 + $0x28] sm:$0x3]
    %v40 = vld [vmem:[%s3] sm:$0xff]
    %42 = vset.pattern.permute.xlu0 0
    %43 = vperm.xlu0 %42, %v40
    %v44 = vpop.permute.xlu0 %43
    %v57 = vunpack.c.l.b16 %v29
    %v58 = vunpack.c.l.b16 %v30
    %v59 = vunpack.c.l.b16 %v31
    %v60 = vunpack.c.l.b16 %v32
    %v61 = vunpack.c.l.b16 %v33
    %v62 = vunpack.c.l.b16 %v34
    %v63 = vunpack.c.l.b16 %v35
    %v64 = vunpack.c.l.b16 %v36
    %v65 = vunpack.c.l.b16 %v37
    %v66 = vunpack.c.l.b16 %v38
    %v67 = vunpack.c.l.b16 %v39
    %v68 = vpack.c.b16 %v58, %v57
    %v69 = vpack.c.b16 %v60, %v59
    %v70 = vpack.c.b16 %v62, %v61
    %v71 = vpack.c.b16 %v64, %v63
    %v72 = vpack.c.b16 %v66, %v65
    %v73 = vpack.c.b16 %v67, %v67
    %vm79 = vcmask 687104
    %v81 = vsel %vm79, %v28, 0
    %vm83 = vcmask 1041408
    %v85 = vsel %vm83, %v73, 0
    %87 = vmatpush.bf16.msra.mxu0 0
    %88 = vmatpush.bf16.msra.mxu0 0
    %89 = vmatpush.bf16.msra.mxu0 %v85
    %90 = vmatpush.bf16.msra.mxu0 %v72
    %91 = vmatpush.bf16.msra.mxu0 %v71
    %92 = vmatpush.bf16.msra.mxu0 %v70
    %93 = vmatpush.bf16.msra.mxu0 %v69
    %94 = vmatpush.bf16.msra.mxu0 %v68
    %95 = vmatmul.bf16.gmra.mxu0 %v81
    %v96 = vpop.f32.mrf.mxu0
    %v97 = vadd.f32 %v44, %v96
    %v98 = vpop.f32.mrf.mxu0
    %99 = vdwg.mxu0
    %vm100 = vcmp.gt.f32.partialorder %v97, 0.0
    %v101 = vmul.f32 %v97, 0.01
    %v102 = vsel %vm100, %v97, %v101
    %v103 = vld [vmem:[%s0] sm:$0x1]
    %v104 = vld [vmem:[%s0 + $0x1] sm:$0x1]
    %v105 = vld [vmem:[%s0 + $0x2] sm:$0x1]
    %v106 = vld [vmem:[%s0 + $0x3] sm:$0x1]
    %vm107 = vcmp.lt.s32.totalorder %v103, %v104
    %v108 = vsel %vm107, 1, 0
    %v109 = vperm.slane %v108, 0
    %vm110 = vcmp.eq.s32.totalorder %v109, 1
    %v111 = vsel %vm110, %v102, -inf
    %vm112 = vcmp.lt.s32.totalorder %v103, %v105
    %v113 = vsel %vm112, 1, 0
    %v114 = vperm.slane %v113, 0
    %vm115 = vcmp.eq.s32.totalorder %v114, 1
    %v116 = vsel %vm115, %v102, -inf
    %vm117 = vcmp.ge.s32.totalorder %v103, %v106
    %v118 = vsel %vm117, 1, 0
    %v119 = vperm.slane %v118, 0
    %vm120 = vcmp.eq.s32.totalorder %v119, 1
    %v121 = vsel %vm120, %v111, -inf
    %v123 = vrot.slane %v116, 4
    %vm125 = vcmask 1043456
    %v126 = vsel %vm125, %v111, %v123
    %vm127 = vcmask 359424
    %v128 = vsel %vm127, %v126, -inf
    %129 = vmax.xlane.f32.xlu0 %v128
    %v130 = vpop.xlane.xlu0 %129
    %vm131 = vcmask 355328
    %v132 = vsel %vm131, %v121, -inf
    %133 = vmax.xlane.f32.xlu0 %v132
    %v134 = vpop.xlane.xlu0 %133
    %vm135 = vcmask 720224
    %v136 = vsel %vm135, %v126, -inf
    %137 = vmax.xlane.f32.xlu0 %v136
    %v138 = vpop.xlane.xlu0 %137
    %vm139 = vcmask 716128
    %v140 = vsel %vm139, %v121, -inf
    %141 = vmax.xlane.f32.xlu0 %v140
    %v142 = vpop.xlane.xlu0 %141
    %vm143 = vcmask 7168
    %v144 = vsel %vm143, %v130, %v138
    %v145 = vsel %vm143, %v134, %v142
    %v146 = vld [vmem:[%s4] sm:$0xff]
    %v147 = vld [vmem:[%s4 + $0x8] sm:$0xff]
    %v148 = vld [vmem:[%s4 + $0x10] sm:$0xff]
    %v149 = vld [vmem:[%s4 + $0x18] sm:$0xff]
    %v150 = vld [vmem:[%s4 + $0x20] sm:$0xff]
    %v151 = vld [vmem:[%s4 + $0x28] sm:$0xff]
    %v152 = vld [vmem:[%s4 + $0x30] sm:$0xff]
    %v153 = vld [vmem:[%s4 + $0x38] sm:$0xff]
    %v154 = vld [vmem:[%s4 + $0x40] sm:$0xff]
    %v155 = vld [vmem:[%s4 + $0x48] sm:$0xff]
    %v156 = vld [vmem:[%s4 + $0x50] sm:$0xff]
    %v158 = vrot.slane %v102, 4
    %vm159 = vcmask 719872
    %v160 = vsel %vm159, %v158, 0
    %162 = vmatpush.msra.mxu0 0.0
    %163 = vmatpush.msra.mxu0 0.0
    %164 = vmatpush.msra.mxu0 0.0
    %165 = vmatpush.msra.mxu0 0.0
    %166 = vmatpush.msra.mxu0 0.0
    %167 = vmatpush.msra.mxu0 %v156
    %168 = vmatpush.msra.mxu0 %v155
    %169 = vmatpush.msra.mxu0 %v154
    %170 = vmatpush.msra.mxu0 %v153
    %171 = vmatpush.msra.mxu0 %v152
    %172 = vmatpush.msra.mxu0 %v151
    %173 = vmatpush.msra.mxu0 %v150
    %174 = vmatpush.msra.mxu0 %v149
    %175 = vmatpush.msra.mxu0 %v148
    %176 = vmatpush.msra.mxu0 %v147
    %177 = vmatpush.msra.mxu0 %v146
    %178 = vmatmul.f32.gmra.mxu0 %v160
    %v179 = vpop.f32.mrf.mxu0
    %v180 = vadd.f32 0.0, %v179
    %181 = vdwg.mxu0
    %v183 = vrot.slane %v180, 4
    %184 = vrot.lane.b32.xlu0 %v183, 126
    %v185 = vpop.permute.xlu0 %184
    %187 = vrot.lane.b32.xlu0 %v180, 124
    %v188 = vpop.permute.xlu0 %187
    %v189 = vsel %vm125, %v180, %v185
    %v191 = vrot.slane %v189, 4
    %v192 = vrot.slane %v188, 4
    %v193 = vsel %vm125, %v191, %v192
    %v196 = vsel %vm125, %v145, %v191
    %v197 = vld [vmem:[%s5] sm:$0x3]
    %v198 = vld [vmem:[%s6] sm:$0x3]
    %200 = vset.pattern.permute.xlu0 0
    %201 = vperm.xlu0 %200, %v198
    %v202 = vpop.permute.xlu0 %201
    %vm204 = vcmask 195584
    %v206 = vsel %vm204, %v197, 0
    %208 = vmatpush.msra.mxu0 0.0
    %209 = vmatpush.msra.mxu0 0.0
    %210 = vmatpush.msra.mxu0 0.0
    %211 = vmatpush.msra.mxu0 0.0
    %212 = vmatpush.msra.mxu0 0.0
    %213 = vmatpush.msra.mxu0 0.0
    %214 = vmatpush.msra.mxu0 0.0
    %215 = vmatpush.msra.mxu0 0.0
    %216 = vmatpush.msra.mxu0 0.0
    %217 = vmatpush.msra.mxu0 0.0
    %218 = vmatpush.msra.mxu0 0.0
    %219 = vmatpush.msra.mxu0 0.0
    %220 = vmatpush.msra.mxu0 0.0
    %221 = vmatpush.msra.mxu0 %v193
    %222 = vmatpush.msra.mxu0 %v196
    %223 = vmatpush.msra.mxu0 %v144
    %224 = vmatmul.f32.gmra.mxu0 %v206
    %v225 = vpop.f32.mrf.mxu0
    %v226 = vadd.f32 %v202, %v225
    %227 = vdwg.mxu0
    %vm228 = vcmask 9216
    %229 = vst.msk [vmem:[#allocation2] sm:$0x3] %vm228, %v226
    // Predicated region
    $region30: #{tpu_custom_call.1} parent=1 // pred_check
      _
    $region31: #{tpu_custom_call.1} parent=1 // pred_check_branch
      %231 = sbr.rel (0) target = $region33
    $region32: #{tpu_custom_call.1} parent=1 // pred_region
      %233 = vsyncadd [#allocation3], 0
      %s235 = sshll.u32 [#allocation2], 4
      %s236 = int_to_ptr.vmem [resolvable:$true] %s235
      %s237 = sshll.u32 %s7, 4
      %s238 = int_to_ptr.hbm [resolvable:$true] %s237
      %240 = dma.vmem_to_hbm [thread:$0]  %s236, 32, %s238, [#allocation3]
    $region33: #{tpu_custom_call.1} parent=1 // pred_fallthru
      _
    // Predicated region
    $region34: #{tpu_custom_call.1} parent=1 // pred_check
      _
    $region35: #{tpu_custom_call.1} parent=1 // pred_check_branch
      %242 = sbr.rel (0) target = $region37
    $region36: #{tpu_custom_call.1} parent=1 // pred_region
      %244 = dma.done [#allocation3], 32
    $region37: #{tpu_custom_call.1} parent=1 // pred_fallthru
      _
    %245 = vsyncpa [#allocation3], 1

</llo_original>
